<compile_context>
chip_gen: v5e
topology: v5e:2x2
jax: 0.10.0
libtpu: 0.0.40
codegen_flags: <defaults>
</compile_context>

<pallas_src>
import jax
import jax.numpy as jnp
from jax.experimental import pallas as pl
from jax.experimental.pallas import tpu as pltpu

F_OUT = 8      # ChebConv / vnr_conn output features
CHEB_K = 3     # Chebyshev order
IN_SUB = 4     # substrate node feature dim
IN_VNR = 2     # virtual node feature dim


# --------------------------------------------------------------------------- kernel
def _actor_critic_kernel(subs_x_ref, l_hat_ref, w_cheb_ref, b_cheb_ref,
                         vnr_row_ref, w_vnr_ref, b_vnr_ref,
                         w_head_ref, b_head_ref,
                         probs_ref, value_ref,
                         zc_ref, fc_ref):
    n = subs_x_ref.shape[0]

    # --- GCNNBlock: ChebConv(4 -> 8, K=3) + ReLU, fused into one matmul -------
    x = subs_x_ref[...]                       # (N, 4)   == Z0
    l_hat = l_hat_ref[...]                    # (N, N)   scaled Laplacian
    z1 = jnp.dot(l_hat, x, preferred_element_type=jnp.float32)
    z2 = 2.0 * jnp.dot(l_hat, z1, preferred_element_type=jnp.float32) - x
    # zcat = [Z0 | Z1 | Z2] built with static lane-offset stores (no reshape/concat).
    zc_ref[:, 0:IN_SUB] = x
    zc_ref[:, IN_SUB:2 * IN_SUB] = z1
    zc_ref[:, 2 * IN_SUB:3 * IN_SUB] = z2
    conv = (jnp.dot(zc_ref[...], w_cheb_ref[...],
                    preferred_element_type=jnp.float32) + b_cheb_ref[...])
    t_s = jnp.tanh(jnp.maximum(conv, 0.0))    # (N, 8)  tanh(ReLU(ChebConv))

    # --- vnr_conn on the selected virtual node only: (1,2)@(2,8)+b ------------
    t_v = jnp.tanh(jnp.dot(vnr_row_ref[...], w_vnr_ref[...],
                           preferred_element_type=jnp.float32) + b_vnr_ref[...])  # (1, 8)

    # --- lane-dense fc: lanes [0:8] = tanh(virt), lanes [8*(i+1):...] = t_s[i] -
    # (permutation + virt-node repeat are already folded into the head weights;
    #  N is small so the flatten is N+1 unrolled static row stores.)
    # TODO(synk): for large N, tile this flatten / the head matmul with a grid.
    fc_ref[0:1, 0:F_OUT] = t_v
    for i in range(n):
        fc_ref[0:1, (i + 1) * F_OUT:(i + 2) * F_OUT] = t_s[i:i + 1, :]

    # --- fused policy + value head: one (1, 8(N+1)) @ (8(N+1), N+1) matmul ----
    head = (jnp.dot(fc_ref[...], w_head_ref[...],
                    preferred_element_type=jnp.float32) + b_head_ref[...])  # (1, N+1)
    logits = head[:, 0:n]                     # (1, N)   policy logits
    value_ref[...] = head[:, n:n + 1]         # (1, 1)   state value

    # --- lane-dense softmax -----------------------------------------------------
    mx = jnp.max(logits, axis=-1, keepdims=True)
    e = jnp.exp(logits - mx)
    denom = jnp.sum(e, axis=-1, keepdims=True)
    probs_ref[...] = e * pl.reciprocal(denom, approx=True)


# --------------------------------------------------------------------------- glue
def _scaled_laplacian(edge_index, num_nodes):
    """L_hat = (2/lambda_max) L - I = -D^{-1/2} A D^{-1/2}  (lambda_max=2, 'sym')."""
    a = jnp.zeros((num_nodes, num_nodes), jnp.float32)
    a = a.at[edge_index[0], edge_index[1]].set(1.0)
    deg = a.sum(axis=1)
    dinv = jnp.where(deg > 0, 1.0 / jnp.sqrt(jnp.maximum(deg, 1e-12)), 0.0)
    return -(dinv[:, None] * a * dinv[None, :])


def actor_critic_forward(subs_x, subs_edge_index, vnr_x, params, perm, j):
    """Pallas implementation of ActorCritic.forward((subs, vnr), j) (j==0 refresh path)."""
    n = subs_x.shape[0]
    half = F_OUT * n                                   # 8 * num_sub
    feat = 2 * half                                    # policy/value in_features
    assert feat == params["w_pol"].shape[1]

    l_hat = _scaled_laplacian(subs_edge_index, n)

    # ---- wrapper-side weight folds (one-time prep in a real RL loop) ----------
    # Fold the permutation:   W @ tanh(flat)[perm] == W[:, argsort(perm)] @ tanh(flat)
    inv_perm = jnp.argsort(perm)
    w_all = jnp.concatenate([params["w_pol"], params["w_val"]], axis=0)[:, inv_perm]  # (N+1, 16N)
    # Fold the virt-node repeat: columns multiplying identical tanh(virt) entries sum.
    w_virt = w_all[:, :half].reshape(n + 1, n, F_OUT).sum(axis=1).T          # (8, N+1)
    w_subs = w_all[:, half:].T                                               # (8N, N+1)
    # Stack into one fused policy+value head matching the fc layout [virt | subs].
    w_head = jnp.concatenate([w_virt, w_subs], axis=0)                       # (8(N+1), N+1)
    b_head = jnp.concatenate([params["b_pol"][:, 0],
                              params["b_val"][0]]).reshape(1, n + 1)         # (1, N+1)

    w_cheb_flat = params["w_cheb"].reshape(CHEB_K * IN_SUB, F_OUT)           # (12, 8)

    # Only the selected virtual node row is needed (no per-j recompile, no (V,2)x(2,8)).
    vnr_row = jax.lax.dynamic_slice_in_dim(vnr_x, j, 1, axis=0)              # (1, 2)

    # ---- cost estimate ---------------------------------------------------------
    flops = 2 * (2 * n * n * IN_SUB                       # Laplacian propagations
                 + n * (CHEB_K * IN_SUB) * F_OUT          # fused Chebyshev matmul
                 + IN_VNR * F_OUT                         # vnr_conn row
                 + F_OUT * (n + 1) * (n + 1))             # fused policy+value head
    transcendentals = F_OUT * (n + 1) + n + 1              # tanh + exp + reciprocal
    bytes_accessed = 4 * (subs_x.size + l_hat.size + w_cheb_flat.size
                          + params["b_cheb"].size + vnr_row.size
                          + params["w_vnr"].size + params["b_vnr"].size
                          + w_head.size + b_head.size
                          + n + 1)
    cost = pl.CostEstimate(flops=int(flops), transcendentals=int(transcendentals),
                           bytes_accessed=int(bytes_accessed))

    vmem = pl.BlockSpec(memory_space=pltpu.MemorySpace.VMEM)
    probs, value = pl.pallas_call(
        _actor_critic_kernel,
        out_shape=(jax.ShapeDtypeStruct((1, n), jnp.float32),    # lane-dense probs
                   jax.ShapeDtypeStruct((1, 1), jnp.float32)),
        in_specs=[vmem] * 9,
        out_specs=(vmem, vmem),
        scratch_shapes=(pltpu.VMEM((n, CHEB_K * IN_SUB), jnp.float32),        # zcat
                        pltpu.VMEM((1, F_OUT * (n + 1)), jnp.float32)),       # fc row
        cost_estimate=cost,
    )(subs_x, l_hat, w_cheb_flat, params["b_cheb"],
      vnr_row, params["w_vnr"], params["b_vnr"],
      w_head, b_head)

    return probs[0], value[0]                 # (num_sub,), (1,) — matches PyTorch


# --------------------------------------------------------------------------- params
def init_params(key, num_sub):
    feat = 2 * F_OUT * num_sub
    ks = jax.random.split(key, 6)
    # ChebConv weights: init_weights() -> uniform(0.0, 0.5); ChebConv bias -> zeros
    w_cheb = jax.random.uniform(ks[0], (CHEB_K, IN_SUB, F_OUT), jnp.float32, 0.0, 0.5)
    b_cheb = jnp.zeros((1, F_OUT), jnp.float32)
    # Linear layers: deterministic small uniform init (synthetic weights)
    w_vnr = jax.random.uniform(ks[1], (IN_VNR, F_OUT), jnp.float32, -0.5, 0.5)
    b_vnr = jax.random.uniform(ks[2], (1, F_OUT), jnp.float32, -0.5, 0.5)
    w_pol = jax.random.uniform(ks[3], (num_sub, feat), jnp.float32, -0.1, 0.1)
    b_pol = jax.random.uniform(ks[4], (num_sub, 1), jnp.float32, -0.1, 0.1)
    w_val = jax.random.uniform(ks[5], (1, feat), jnp.float32, -0.1, 0.1)
    b_val = jnp.zeros((1, 1), jnp.float32)
    return dict(w_cheb=w_cheb, b_cheb=b_cheb, w_vnr=w_vnr, b_vnr=b_vnr,
                w_pol=w_pol, b_pol=b_pol, w_val=w_val, b_val=b_val)


# --------------------------------------------------------------------------- reference
def _reference(subs_x, subs_edge_index, vnr_x, params, perm, j):
    n = subs_x.shape[0]
    l_hat = _scaled_laplacian(subs_edge_index, n)
    z0 = subs_x
    z1 = l_hat @ z0
    z2 = 2.0 * l_hat @ z1 - z0
    conv = (z0 @ params["w_cheb"][0] + z1 @ params["w_cheb"][1]
            + z2 @ params["w_cheb"][2] + params["b_cheb"])
    sg = jnp.maximum(conv, 0.0)
    vg = vnr_x @ params["w_vnr"] + params["b_vnr"]
    vn = jnp.tile(vg[j:j + 1, :], (n, 1))
    flat = jnp.concatenate([vn, sg], axis=0).reshape(-1)
    fc = jnp.tanh(flat[perm])
    logits = params["w_pol"] @ fc + params["b_pol"][:, 0]
    probs = jax.nn.softmax(logits)
    value = params["w_val"] @ fc + params["b_val"][:, 0]
    return probs, value


# --------------------------------------------------------------------------- main
if __name__ == "__main__":
    num_sub = 8          # substrate nodes  -> policy/value in_features = 2*8*8 = 128
    num_vnr = 5          # virtual nodes (matches self.virt_graph = zeros(5, 4) sizing)
    j = 0                # first VNR node (the path that refreshes virt_graph)

    key = jax.random.PRNGKey(0)
    k_par, k_sub, k_vnr, k_perm = jax.random.split(key, 4)

    params = init_params(k_par, num_sub)

    # substrate graph: ring on num_sub nodes (undirected -> both directions)
    src = jnp.arange(num_sub, dtype=jnp.int32)
    dst = (src + 1) % num_sub
    subs_edge_index = jnp.stack(
        [jnp.concatenate([src, dst]), jnp.concatenate([dst, src])], axis=0)   # (2, 2*num_sub)

    subs_x = jax.random.uniform(k_sub, (num_sub, IN_SUB), jnp.float32)        # subs.x
    vnr_x = jax.random.uniform(k_vnr, (num_vnr, IN_VNR), jnp.float32)         # vnr.x

    # deterministic stand-in for torch.randperm(2*8*num_sub)
    perm = jax.random.permutation(k_perm, 2 * F_OUT * num_sub).astype(jnp.int32)

    probs, value = actor_critic_forward(subs_x, subs_edge_index, vnr_x, params, perm, j)
    jax.block_until_ready((probs, value))

    probs_ref, value_ref = _reference(subs_x, subs_edge_index, vnr_x, params, perm, j)
    assert probs.shape == (num_sub,) and value.shape == (1,)
    # probs tolerance is relaxed because of pl.reciprocal(approx=True) in the softmax.
    assert jnp.allclose(probs, probs_ref, atol=2e-3, rtol=2e-3)
    assert jnp.allclose(value, value_ref, atol=5e-5, rtol=5e-5)
    assert jnp.allclose(jnp.sum(probs), 1.0, atol=2e-3)

    print("KERNEL_OK")
</pallas_src>

<mosaic_0001>
module attributes {stable_mosaic.version = 11 : i64} {
  func.func @_actor_critic_kernel(%arg0: memref<8x4xf32, #tpu.memory_space<vmem>>, %arg1: memref<8x8xf32, #tpu.memory_space<vmem>>, %arg2: memref<12x8xf32, #tpu.memory_space<vmem>>, %arg3: memref<1x8xf32, #tpu.memory_space<vmem>>, %arg4: memref<1x2xf32, #tpu.memory_space<vmem>>, %arg5: memref<2x8xf32, #tpu.memory_space<vmem>>, %arg6: memref<1x8xf32, #tpu.memory_space<vmem>>, %arg7: memref<72x9xf32, #tpu.memory_space<vmem>>, %arg8: memref<1x9xf32, #tpu.memory_space<vmem>>, %arg9: memref<1x8xf32, #tpu.memory_space<vmem>>, %arg10: memref<1x1xf32, #tpu.memory_space<vmem>>, %arg11: memref<8x12xf32, #tpu.memory_space<vmem>>, %arg12: memref<1x72xf32, #tpu.memory_space<vmem>>) attributes {dimension_semantics = [], scalar_prefetch = 0 : i64, scratch_operands = 2 : i64, tpu.core_type = #tpu.core_type<tc>} {
    %c0 = arith.constant 0 : index
    %c0_0 = arith.constant 0 : index
    %0 = vector.load %arg0[%c0, %c0_0] : memref<8x4xf32, #tpu.memory_space<vmem>>, vector<8x4xf32>
    %c0_1 = arith.constant 0 : index
    %c0_2 = arith.constant 0 : index
    %1 = vector.load %arg1[%c0_1, %c0_2] : memref<8x8xf32, #tpu.memory_space<vmem>>, vector<8x8xf32>
    %cst = arith.constant dense<0.000000e+00> : vector<8x4xf32>
    %2 = tpu.matmul %1, %0, %cst {dimension_numbers = #tpu.dot_dimension_numbers<[1], [0], [0], [1], [0, 0, 1, 1], [], []>} : vector<8x8xf32>, vector<8x4xf32>, vector<8x4xf32> -> vector<8x4xf32>
    %cst_3 = arith.constant dense<0.000000e+00> : vector<8x4xf32>
    %3 = tpu.matmul %1, %2, %cst_3 {dimension_numbers = #tpu.dot_dimension_numbers<[1], [0], [0], [1], [0, 0, 1, 1], [], []>} : vector<8x8xf32>, vector<8x4xf32>, vector<8x4xf32> -> vector<8x4xf32>
    %cst_4 = arith.constant 2.000000e+00 : f32
    %4 = vector.broadcast %cst_4 : f32 to vector<8x4xf32>
    %5 = arith.mulf %4, %3 : vector<8x4xf32>
    %6 = arith.subf %5, %0 : vector<8x4xf32>
    %c0_5 = arith.constant 0 : index
    %c0_6 = arith.constant 0 : index
    %7 = vector.load %arg11[%c0_5, %c0_6] : memref<8x12xf32, #tpu.memory_space<vmem>>, vector<8x4xf32>
    tpu.vector_store %arg11[%c0_5, %c0_6], %0 {strides = array<i32>} : memref<8x12xf32, #tpu.memory_space<vmem>>, vector<8x4xf32>,
    %c0_7 = arith.constant 0 : index
    %c4 = arith.constant 4 : index
    %8 = vector.load %arg11[%c0_7, %c4] : memref<8x12xf32, #tpu.memory_space<vmem>>, vector<8x4xf32>
    tpu.vector_store %arg11[%c0_7, %c4], %2 {strides = array<i32>} : memref<8x12xf32, #tpu.memory_space<vmem>>, vector<8x4xf32>,
    %c0_8 = arith.constant 0 : index
    %c8 = arith.constant 8 : index
    %9 = vector.load %arg11[%c0_8, %c8] : memref<8x12xf32, #tpu.memory_space<vmem>>, vector<8x4xf32>
    tpu.vector_store %arg11[%c0_8, %c8], %6 {strides = array<i32>} : memref<8x12xf32, #tpu.memory_space<vmem>>, vector<8x4xf32>,
    %c0_9 = arith.constant 0 : index
    %c0_10 = arith.constant 0 : index
    %10 = vector.load %arg11[%c0_9, %c0_10] : memref<8x12xf32, #tpu.memory_space<vmem>>, vector<8x12xf32>
    %c0_11 = arith.constant 0 : index
    %c0_12 = arith.constant 0 : index
    %11 = vector.load %arg2[%c0_11, %c0_12] : memref<12x8xf32, #tpu.memory_space<vmem>>, vector<12x8xf32>
    %cst_13 = arith.constant dense<0.000000e+00> : vector<8x8xf32>
    %12 = tpu.matmul %10, %11, %cst_13 {dimension_numbers = #tpu.dot_dimension_numbers<[1], [0], [0], [1], [0, 0, 1, 1], [], []>} : vector<8x12xf32>, vector<12x8xf32>, vector<8x8xf32> -> vector<8x8xf32>
    %c0_14 = arith.constant 0 : index
    %c0_15 = arith.constant 0 : index
    %13 = vector.load %arg3[%c0_14, %c0_15] : memref<1x8xf32, #tpu.memory_space<vmem>>, vector<1x8xf32>
    %14 = vector.broadcast %13 : vector<1x8xf32> to vector<8x8xf32>
    %15 = arith.addf %12, %14 : vector<8x8xf32>
    %cst_16 = arith.constant 0.000000e+00 : f32
    %16 = vector.broadcast %cst_16 : f32 to vector<8x8xf32>
    %17 = arith.maximumf %15, %16 : vector<8x8xf32>
    %18 = math.tanh %17 : vector<8x8xf32>
    %c0_17 = arith.constant 0 : index
    %c0_18 = arith.constant 0 : index
    %19 = vector.load %arg4[%c0_17, %c0_18] : memref<1x2xf32, #tpu.memory_space<vmem>>, vector<1x2xf32>
    %c0_19 = arith.constant 0 : index
    %c0_20 = arith.constant 0 : index
    %20 = vector.load %arg5[%c0_19, %c0_20] : memref<2x8xf32, #tpu.memory_space<vmem>>, vector<2x8xf32>
    %cst_21 = arith.constant dense<0.000000e+00> : vector<1x8xf32>
    %21 = tpu.matmul %19, %20, %cst_21 {dimension_numbers = #tpu.dot_dimension_numbers<[1], [0], [0], [1], [0, 0, 1, 1], [], []>} : vector<1x2xf32>, vector<2x8xf32>, vector<1x8xf32> -> vector<1x8xf32>
    %c0_22 = arith.constant 0 : index
    %c0_23 = arith.constant 0 : index
    %22 = vector.load %arg6[%c0_22, %c0_23] : memref<1x8xf32, #tpu.memory_space<vmem>>, vector<1x8xf32>
    %23 = arith.addf %21, %22 : vector<1x8xf32>
    %24 = math.tanh %23 : vector<1x8xf32>
    %c0_24 = arith.constant 0 : index
    %c0_25 = arith.constant 0 : index
    %25 = vector.load %arg12[%c0_24, %c0_25] : memref<1x72xf32, #tpu.memory_space<vmem>>, vector<1x8xf32>
    tpu.vector_store %arg12[%c0_24, %c0_25], %24 {strides = array<i32>} : memref<1x72xf32, #tpu.memory_space<vmem>>, vector<1x8xf32>,
    %26 = vector.extract_strided_slice %18 {offsets = [0, 0], sizes = [1, 8], strides = [1, 1]} : vector<8x8xf32> to vector<1x8xf32>
    %c0_26 = arith.constant 0 : index
    %c8_27 = arith.constant 8 : index
    %27 = vector.load %arg12[%c0_26, %c8_27] : memref<1x72xf32, #tpu.memory_space<vmem>>, vector<1x8xf32>
    tpu.vector_store %arg12[%c0_26, %c8_27], %26 {strides = array<i32>} : memref<1x72xf32, #tpu.memory_space<vmem>>, vector<1x8xf32>,
    %28 = vector.extract_strided_slice %18 {offsets = [1, 0], sizes = [1, 8], strides = [1, 1]} : vector<8x8xf32> to vector<1x8xf32>
    %c0_28 = arith.constant 0 : index
    %c16 = arith.constant 16 : index
    %29 = vector.load %arg12[%c0_28, %c16] : memref<1x72xf32, #tpu.memory_space<vmem>>, vector<1x8xf32>
    tpu.vector_store %arg12[%c0_28, %c16], %28 {strides = array<i32>} : memref<1x72xf32, #tpu.memory_space<vmem>>, vector<1x8xf32>,
    %30 = vector.extract_strided_slice %18 {offsets = [2, 0], sizes = [1, 8], strides = [1, 1]} : vector<8x8xf32> to vector<1x8xf32>
    %c0_29 = arith.constant 0 : index
    %c24 = arith.constant 24 : index
    %31 = vector.load %arg12[%c0_29, %c24] : memref<1x72xf32, #tpu.memory_space<vmem>>, vector<1x8xf32>
    tpu.vector_store %arg12[%c0_29, %c24], %30 {strides = array<i32>} : memref<1x72xf32, #tpu.memory_space<vmem>>, vector<1x8xf32>,
    %32 = vector.extract_strided_slice %18 {offsets = [3, 0], sizes = [1, 8], strides = [1, 1]} : vector<8x8xf32> to vector<1x8xf32>
    %c0_30 = arith.constant 0 : index
    %c32 = arith.constant 32 : index
    %33 = vector.load %arg12[%c0_30, %c32] : memref<1x72xf32, #tpu.memory_space<vmem>>, vector<1x8xf32>
    tpu.vector_store %arg12[%c0_30, %c32], %32 {strides = array<i32>} : memref<1x72xf32, #tpu.memory_space<vmem>>, vector<1x8xf32>,
    %34 = vector.extract_strided_slice %18 {offsets = [4, 0], sizes = [1, 8], strides = [1, 1]} : vector<8x8xf32> to vector<1x8xf32>
    %c0_31 = arith.constant 0 : index
    %c40 = arith.constant 40 : index
    %35 = vector.load %arg12[%c0_31, %c40] : memref<1x72xf32, #tpu.memory_space<vmem>>, vector<1x8xf32>
    tpu.vector_store %arg12[%c0_31, %c40], %34 {strides = array<i32>} : memref<1x72xf32, #tpu.memory_space<vmem>>, vector<1x8xf32>,
    %36 = vector.extract_strided_slice %18 {offsets = [5, 0], sizes = [1, 8], strides = [1, 1]} : vector<8x8xf32> to vector<1x8xf32>
    %c0_32 = arith.constant 0 : index
    %c48 = arith.constant 48 : index
    %37 = vector.load %arg12[%c0_32, %c48] : memref<1x72xf32, #tpu.memory_space<vmem>>, vector<1x8xf32>
    tpu.vector_store %arg12[%c0_32, %c48], %36 {strides = array<i32>} : memref<1x72xf32, #tpu.memory_space<vmem>>, vector<1x8xf32>,
    %38 = vector.extract_strided_slice %18 {offsets = [6, 0], sizes = [1, 8], strides = [1, 1]} : vector<8x8xf32> to vector<1x8xf32>
    %c0_33 = arith.constant 0 : index
    %c56 = arith.constant 56 : index
    %39 = vector.load %arg12[%c0_33, %c56] : memref<1x72xf32, #tpu.memory_space<vmem>>, vector<1x8xf32>
    tpu.vector_store %arg12[%c0_33, %c56], %38 {strides = array<i32>} : memref<1x72xf32, #tpu.memory_space<vmem>>, vector<1x8xf32>,
    %40 = vector.extract_strided_slice %18 {offsets = [7, 0], sizes = [1, 8], strides = [1, 1]} : vector<8x8xf32> to vector<1x8xf32>
    %c0_34 = arith.constant 0 : index
    %c64 = arith.constant 64 : index
    %41 = vector.load %arg12[%c0_34, %c64] : memref<1x72xf32, #tpu.memory_space<vmem>>, vector<1x8xf32>
    tpu.vector_store %arg12[%c0_34, %c64], %40 {strides = array<i32>} : memref<1x72xf32, #tpu.memory_space<vmem>>, vector<1x8xf32>,
    %c0_35 = arith.constant 0 : index
    %c0_36 = arith.constant 0 : index
    %42 = vector.load %arg12[%c0_35, %c0_36] : memref<1x72xf32, #tpu.memory_space<vmem>>, vector<1x72xf32>
    %c0_37 = arith.constant 0 : index
    %c0_38 = arith.constant 0 : index
    %43 = vector.load %arg7[%c0_37, %c0_38] : memref<72x9xf32, #tpu.memory_space<vmem>>, vector<72x9xf32>
    %cst_39 = arith.constant dense<0.000000e+00> : vector<1x9xf32>
    %44 = tpu.matmul %42, %43, %cst_39 {dimension_numbers = #tpu.dot_dimension_numbers<[1], [0], [0], [1], [0, 0, 1, 1], [], []>} : vector<1x72xf32>, vector<72x9xf32>, vector<1x9xf32> -> vector<1x9xf32>
    %c0_40 = arith.constant 0 : index
    %c0_41 = arith.constant 0 : index
    %45 = vector.load %arg8[%c0_40, %c0_41] : memref<1x9xf32, #tpu.memory_space<vmem>>, vector<1x9xf32>
    %46 = arith.addf %44, %45 : vector<1x9xf32>
    %47 = vector.extract_strided_slice %46 {offsets = [0, 0], sizes = [1, 8], strides = [1, 1]} : vector<1x9xf32> to vector<1x8xf32>
    %48 = vector.extract_strided_slice %46 {offsets = [0, 8], sizes = [1, 1], strides = [1, 1]} : vector<1x9xf32> to vector<1x1xf32>
    %c0_42 = arith.constant 0 : index
    %c0_43 = arith.constant 0 : index
    %49 = vector.load %arg10[%c0_42, %c0_43] : memref<1x1xf32, #tpu.memory_space<vmem>>, vector<1x1xf32>
    tpu.vector_store %arg10[%c0_42, %c0_43], %48 {strides = array<i32>} : memref<1x1xf32, #tpu.memory_space<vmem>>, vector<1x1xf32>,
    %cst_44 = arith.constant dense<0xFF800000> : vector<1xf32>
    %50 = vector.multi_reduction <maximumf>, %47, %cst_44 [1] : vector<1x8xf32> to vector<1xf32>
    %51 = vector.shape_cast %50 : vector<1xf32> to vector<1x1xf32>
    %52 = vector.broadcast %51 : vector<1x1xf32> to vector<1x8xf32>
    %53 = arith.subf %47, %52 : vector<1x8xf32>
    %54 = math.exp %53 : vector<1x8xf32>
    %cst_45 = arith.constant dense<0.000000e+00> : vector<1xf32>
    %55 = vector.multi_reduction <add>, %54, %cst_45 [1] : vector<1x8xf32> to vector<1xf32>
    %56 = vector.shape_cast %55 : vector<1xf32> to vector<1x1xf32>
    %57 = tpu.reciprocal %56 {approx = true} : vector<1x1xf32> -> vector<1x1xf32>
    %58 = vector.broadcast %57 : vector<1x1xf32> to vector<1x8xf32>
    %59 = arith.mulf %54, %58 : vector<1x8xf32>
    %c0_46 = arith.constant 0 : index
    %c0_47 = arith.constant 0 : index
    %60 = vector.load %arg9[%c0_46, %c0_47] : memref<1x8xf32, #tpu.memory_space<vmem>>, vector<1x8xf32>
    tpu.vector_store %arg9[%c0_46, %c0_47], %59 {strides = array<i32>} : memref<1x8xf32, #tpu.memory_space<vmem>>, vector<1x8xf32>,
    return
  }
}

</mosaic_0001>

<llo_original>
// kernel: tpu_custom_call.1
$region0: #{tpu_custom_call.1}
  #allocation0 [shape = 'u32[]', space=smem, size = 0x4, offset = 0x4, fixed_abs, tag = 'smem constant byte address 0x4 - core index']
  #allocation1 [shape = 'u32[72,128]{1,0:T(1,128)}', space=vmem, size = 0x9000, scoped, tag = 'internal scratch']
  #allocation2 [shape = 'f32[8,12]{1,0:T(8,128)}', space=vmem, size = 0x1000, scoped, tag = 'scratch operand']
  #allocation3 [shape = 'f32[1,72]{1,0:T(1,128)}', space=vmem, size = 0x200, scoped, tag = 'scratch operand']
  %s0 = inlined_call_operand.vmem [shape: f32[8,4], index: 0, kind: input, shape index: {}]
  %s1 = inlined_call_operand.vmem [shape: f32[8,8], index: 1, kind: input, shape index: {}]
  %s2 = inlined_call_operand.vmem [shape: f32[12,8], index: 2, kind: input, shape index: {}]
  %s3 = inlined_call_operand.vmem [shape: f32[1,8], index: 3, kind: input, shape index: {}]
  %s4 = inlined_call_operand.vmem [shape: f32[1,2], index: 4, kind: input, shape index: {}]
  %s5 = inlined_call_operand.vmem [shape: f32[2,8], index: 5, kind: input, shape index: {}]
  %s6 = inlined_call_operand.vmem [shape: f32[1,8], index: 6, kind: input, shape index: {}]
  %s7 = inlined_call_operand.vmem [shape: f32[72,9], index: 7, kind: input, shape index: {}]
  %s8 = inlined_call_operand.vmem [shape: f32[1,9], index: 8, kind: input, shape index: {}]
  %s9 = inlined_call_operand.hbm [shape: f32[1,8], index: 9, kind: output, shape index: {0}]
  %s10 = inlined_call_operand.hbm [shape: f32[1,1], index: 10, kind: output, shape index: {1}]
  %11 = xla_tuple %s9, %s10
  %s12 = sld [smem:[#allocation0]]
  $region54: #{tpu_custom_call.1} parent=0
    _
  %s14 = ssub.s32 1, %s12
  %s15 = scalar_select 0, %s14, %s12
  $region1: #{tpu_custom_call.1} parent=0
    #allocation4 [shape = 'u8[512]{0}', space=vmem, size = 0x400, scoped, tag = 'output window, operand 0, single buffered']
    #allocation5 [shape = 's32[1]{0}', space=sflag, size = 0x4, scoped, tag = 'scoped memory for tpu_custom_call.1']
    #allocation6 [shape = 'u8[512]{0}', space=vmem, size = 0x400, scoped, tag = 'output window, operand 1, single buffered']
    #allocation7 [shape = 's32[1]{0}', space=sflag, size = 0x4, scoped, tag = 'scoped memory for tpu_custom_call.1']
    %16 = vsyncpa [#allocation5], 0
    %17 = vsyncpa [#allocation7], 0
    // Predicated region
    $region2: #{tpu_custom_call.1} parent=1 // pred_check
      _
    $region3: #{tpu_custom_call.1} parent=1 // pred_check_branch
      %19 = sbr.rel (0) target = $region5
    $region4: #{tpu_custom_call.1} parent=1 // pred_region
      _
    $region5: #{tpu_custom_call.1} parent=1 // pred_fallthru
      _
    // Predicated region
    $region6: #{tpu_custom_call.1} parent=1 // pred_check
      _
    $region7: #{tpu_custom_call.1} parent=1 // pred_check_branch
      %21 = sbr.rel (0) target = $region9
    $region8: #{tpu_custom_call.1} parent=1 // pred_region
      _
    $region9: #{tpu_custom_call.1} parent=1 // pred_fallthru
      _
    // Predicated region
    $region10: #{tpu_custom_call.1} parent=1 // pred_check
      _
    $region11: #{tpu_custom_call.1} parent=1 // pred_check_branch
      %23 = sbr.rel (0) target = $region13
    $region12: #{tpu_custom_call.1} parent=1 // pred_region
      _
    $region13: #{tpu_custom_call.1} parent=1 // pred_fallthru
      _
    // Predicated region
    $region14: #{tpu_custom_call.1} parent=1 // pred_check
      _
    $region15: #{tpu_custom_call.1} parent=1 // pred_check_branch
      %25 = sbr.rel (0) target = $region17
    $region16: #{tpu_custom_call.1} parent=1 // pred_region
      _
    $region17: #{tpu_custom_call.1} parent=1 // pred_fallthru
      _
    // Predicated region
    $region18: #{tpu_custom_call.1} parent=1 // pred_check
      _
    $region19: #{tpu_custom_call.1} parent=1 // pred_check_branch
      %27 = sbr.rel (0) target = $region21
    $region20: #{tpu_custom_call.1} parent=1 // pred_region
      _
    $region21: #{tpu_custom_call.1} parent=1 // pred_fallthru
      _
    // Predicated region
    $region22: #{tpu_custom_call.1} parent=1 // pred_check
      _
    $region23: #{tpu_custom_call.1} parent=1 // pred_check_branch
      %29 = sbr.rel (0) target = $region25
    $region24: #{tpu_custom_call.1} parent=1 // pred_region
      _
    $region25: #{tpu_custom_call.1} parent=1 // pred_fallthru
      _
    // Predicated region
    $region26: #{tpu_custom_call.1} parent=1 // pred_check
      _
    $region27: #{tpu_custom_call.1} parent=1 // pred_check_branch
      %31 = sbr.rel (0) target = $region29
    $region28: #{tpu_custom_call.1} parent=1 // pred_region
      _
    $region29: #{tpu_custom_call.1} parent=1 // pred_fallthru
      _
    // Predicated region
    $region30: #{tpu_custom_call.1} parent=1 // pred_check
      _
    $region31: #{tpu_custom_call.1} parent=1 // pred_check_branch
      %33 = sbr.rel (0) target = $region33
    $region32: #{tpu_custom_call.1} parent=1 // pred_region
      _
    $region33: #{tpu_custom_call.1} parent=1 // pred_fallthru
      _
    // Predicated region
    $region34: #{tpu_custom_call.1} parent=1 // pred_check
      _
    $region35: #{tpu_custom_call.1} parent=1 // pred_check_branch
      %35 = sbr.rel (0) target = $region37
    $region36: #{tpu_custom_call.1} parent=1 // pred_region
      _
    $region37: #{tpu_custom_call.1} parent=1 // pred_fallthru
      _
    %v36 = vld [vmem:[%s0] sm:$0xff]
    %v37 = vld [vmem:[%s1] sm:$0xff]
    %vm38 = vcmask 64512
    %v40 = vsel %vm38, %v37, 0
    %42 = vmatpush.msra.mxu0 0.0
    %43 = vmatpush.msra.mxu0 0.0
    %44 = vmatpush.msra.mxu0 0.0
    %45 = vmatpush.msra.mxu0 0.0
    %46 = vmatpush.msra.mxu0 0.0
    %47 = vmatpush.msra.mxu0 0.0
    %48 = vmatpush.msra.mxu0 0.0
    %49 = vmatpush.msra.mxu0 0.0
    %50 = vmatpush.msra.mxu0 0.0
    %51 = vmatpush.msra.mxu0 0.0
    %52 = vmatpush.msra.mxu0 0.0
    %53 = vmatpush.msra.mxu0 0.0
    %54 = vmatpush.msra.mxu0 0.0
    %55 = vmatpush.msra.mxu0 0.0
    %56 = vmatpush.msra.mxu0 0.0
    %57 = vmatpush.msra.mxu0 %v36
    %58 = vmatmul.f32.gmra.mxu0 %v40
    %v59 = vpop.f32.mrf.mxu0
    %v60 = vadd.f32 0.0, %v59
    %61 = vdwg.mxu0
    %62 = vmatpush.msra.mxu0 0.0
    %63 = vmatpush.msra.mxu0 0.0
    %64 = vmatpush.msra.mxu0 0.0
    %65 = vmatpush.msra.mxu0 0.0
    %66 = vmatpush.msra.mxu0 0.0
    %67 = vmatpush.msra.mxu0 0.0
    %68 = vmatpush.msra.mxu0 0.0
    %69 = vmatpush.msra.mxu0 0.0
    %70 = vmatpush.msra.mxu0 0.0
    %71 = vmatpush.msra.mxu0 0.0
    %72 = vmatpush.msra.mxu0 0.0
    %73 = vmatpush.msra.mxu0 0.0
    %74 = vmatpush.msra.mxu0 0.0
    %75 = vmatpush.msra.mxu0 0.0
    %76 = vmatpush.msra.mxu0 0.0
    %77 = vmatpush.msra.mxu0 %v60
    %78 = vmatmul.f32.gmra.mxu0 %v40
    %v79 = vpop.f32.mrf.mxu0
    %v80 = vadd.f32 0.0, %v79
    %81 = vdwg.mxu0
    %v82 = vmul.f32 %v80, 2.0
    %v83 = vsub.f32 %v82, %v36
    %vm84 = vcmask 31744
    %85 = vst.msk [vmem:[#allocation2] sm:$0xff] %vm84, %v36
    %87 = vrot.lane.b32.xlu0 %v60, 4
    %v88 = vpop.permute.xlu0 %87
    %vm90 = vcmask 64544
    %91 = vst.msk [vmem:[#allocation2] sm:$0xff] %vm90, %v88
    %93 = vrot.lane.b32.xlu0 %v83, 8
    %v94 = vpop.permute.xlu0 %93
    %vm96 = vcmask 97344
    %97 = vst.msk [vmem:[#allocation2] sm:$0xff] %vm96, %v94
    %v98 = vld [vmem:[#allocation2] sm:$0xff]
    %v99 = vld [vmem:[%s2] sm:$0xff]
    %v100 = vld [vmem:[%s2 + $0x8] sm:$0xf]
    %v101 = vld [vmem:[%s3] sm:$0x1]
    %v103 = vperm.slane %v101, 0
    %vm105 = vcmask 97280
    %v107 = vsel %vm105, %v98, 0
    %vm109 = vcmask 1043456
    %v111 = vsel %vm109, %v100, 0
    %113 = vmatpush.msra.mxu0 0.0
    %114 = vmatpush.msra.mxu0 0.0
    %115 = vmatpush.msra.mxu0 0.0
    %116 = vmatpush.msra.mxu0 0.0
    %117 = vmatpush.msra.mxu0 0.0
    %118 = vmatpush.msra.mxu0 0.0
    %119 = vmatpush.msra.mxu0 0.0
    %120 = vmatpush.msra.mxu0 0.0
    %121 = vmatpush.msra.mxu0 0.0
    %122 = vmatpush.msra.mxu0 0.0
    %123 = vmatpush.msra.mxu0 0.0
    %124 = vmatpush.msra.mxu0 0.0
    %125 = vmatpush.msra.mxu0 0.0
    %126 = vmatpush.msra.mxu0 0.0
    %127 = vmatpush.msra.mxu0 %v111
    %128 = vmatpush.msra.mxu0 %v99
    %129 = vmatmul.f32.gmra.mxu0 %v107
    %v130 = vpop.f32.mrf.mxu0
    %v131 = vadd.f32 %v103, %v130
    %132 = vdwg.mxu0
    %v133 = vmax.f32 %v131, 0.0
    %v134 = vtanh.pop %v133
    %v135 = vld [vmem:[%s4] sm:$0x1]
    %v136 = vld [vmem:[%s5] sm:$0x3]
    %v137 = vld [vmem:[%s6] sm:$0x1]
    %vm138 = vcmask 15360
    %v140 = vsel %vm138, %v135, 0
    %vm142 = vcmask 1041408
    %v144 = vsel %vm142, %v136, 0
    %146 = vmatpush.msra.mxu0 0.0
    %147 = vmatpush.msra.mxu0 0.0
    %148 = vmatpush.msra.mxu0 0.0
    %149 = vmatpush.msra.mxu0 0.0
    %150 = vmatpush.msra.mxu0 0.0
    %151 = vmatpush.msra.mxu0 0.0
    %152 = vmatpush.msra.mxu0 0.0
    %153 = vmatpush.msra.mxu0 0.0
    %154 = vmatpush.msra.mxu0 0.0
    %155 = vmatpush.msra.mxu0 0.0
    %156 = vmatpush.msra.mxu0 0.0
    %157 = vmatpush.msra.mxu0 0.0
    %158 = vmatpush.msra.mxu0 0.0
    %159 = vmatpush.msra.mxu0 0.0
    %160 = vmatpush.msra.mxu0 0.0
    %161 = vmatpush.msra.mxu0 %v144
    %162 = vmatmul.f32.gmra.mxu0 %v140
    %v163 = vpop.f32.mrf.mxu0
    %v164 = vadd.f32 %v137, %v163
    %165 = vdwg.mxu0
    %v166 = vtanh.pop %v164
    %vm167 = vcmask 57344
    %168 = vst.msk [vmem:[#allocation3] sm:$0x1] %vm167, %v166
    %170 = vrot.lane.b32.xlu0 %v134, 8
    %v171 = vpop.permute.xlu0 %170
    %vm173 = vcmask 122944
    %174 = vst.msk [vmem:[#allocation3] sm:$0x1] %vm173, %v171
    %175 = vrot.lane.b32.xlu0 %v134, 16
    %v176 = vpop.permute.xlu0 %175
    %vm178 = vcmask 189569
    %179 = vst.msk [vmem:[#allocation3 - $0x1] sm:$0x2] %vm178, %v176
    %180 = vrot.lane.b32.xlu0 %v134, 24
    %v181 = vpop.permute.xlu0 %180
    %vm183 = vcmask 256194
    %184 = vst.msk [vmem:[#allocation3 - $0x2] sm:$0x4] %vm183, %v181
    %185 = vrot.lane.b32.xlu0 %v134, 32
    %v186 = vpop.permute.xlu0 %185
    %vm188 = vcmask 322819
    %189 = vst.msk [vmem:[#allocation3 - $0x3] sm:$0x8] %vm188, %v186
    %190 = vrot.lane.b32.xlu0 %v134, 40
    %v191 = vpop.permute.xlu0 %190
    %vm193 = vcmask 389444
    %194 = vst.msk [vmem:[#allocation3 - $0x4] sm:$0x10] %vm193, %v191
    %195 = vrot.lane.b32.xlu0 %v134, 48
    %v196 = vpop.permute.xlu0 %195
    %vm198 = vcmask 456069
    %199 = vst.msk [vmem:[#allocation3 - $0x5] sm:$0x20] %vm198, %v196
    %200 = vrot.lane.b32.xlu0 %v134, 56
    %v201 = vpop.permute.xlu0 %200
    %vm203 = vcmask 522694
    %204 = vst.msk [vmem:[#allocation3 - $0x6] sm:$0x40] %vm203, %v201
    %205 = vrot.lane.b32.xlu0 %v134, 64
    %v206 = vpop.permute.xlu0 %205
    %vm208 = vcmask 589319
    %209 = vst.msk [vmem:[#allocation3 - $0x7] sm:$0x80] %vm208, %v206
    %v210 = vld [vmem:[#allocation3] sm:$0x1]
    %v211 = vld [vmem:[%s7] sm:$0xff]
    %v212 = vld [vmem:[%s7 + $0x8] sm:$0xff]
    %v213 = vld [vmem:[%s7 + $0x10] sm:$0xff]
    %v214 = vld [vmem:[%s7 + $0x18] sm:$0xff]
    %v215 = vld [vmem:[%s7 + $0x20] sm:$0xff]
    %v216 = vld [vmem:[%s7 + $0x28] sm:$0xff]
    %v217 = vld [vmem:[%s7 + $0x30] sm:$0xff]
    %v218 = vld [vmem:[%s7 + $0x38] sm:$0xff]
    %v219 = vld [vmem:[%s7 + $0x40] sm:$0xff]
    %v220 = vld [vmem:[%s8] sm:$0x1]
    %vm221 = vcmask 588800
    %v223 = vsel %vm221, %v210, 0
    %225 = vmatpush.msra.mxu0 0.0
    %226 = vmatpush.msra.mxu0 0.0
    %227 = vmatpush.msra.mxu0 0.0
    %228 = vmatpush.msra.mxu0 0.0
    %229 = vmatpush.msra.mxu0 0.0
    %230 = vmatpush.msra.mxu0 0.0
    %231 = vmatpush.msra.mxu0 0.0
    %232 = vmatpush.msra.mxu0 %v219
    %233 = vmatpush.msra.mxu0 %v218
    %234 = vmatpush.msra.mxu0 %v217
    %235 = vmatpush.msra.mxu0 %v216
    %236 = vmatpush.msra.mxu0 %v215
    %237 = vmatpush.msra.mxu0 %v214
    %238 = vmatpush.msra.mxu0 %v213
    %239 = vmatpush.msra.mxu0 %v212
    %240 = vmatpush.msra.mxu0 %v211
    %241 = vmatmul.f32.gmra.mxu0 %v223
    %v242 = vpop.f32.mrf.mxu0
    %v243 = vadd.f32 %v220, %v242
    %244 = vdwg.mxu0
    %246 = vrot.lane.b32.xlu0 %v243, 120
    %v247 = vpop.permute.xlu0 %246
    %vm249 = vcmask 0
    %250 = vst.msk [vmem:[#allocation6] sm:$0x1] %vm249, %v247
    %v251 = vsel %vm167, %v243, -inf
    %252 = vmax.xlane.f32.xlu0 %v251
    %v253 = vpop.xlane.xlu0 %252
    %v254 = vsub.f32 %v243, %v253
    %v255 = vmul.f32 %v254, 1.442695
    %v256 = vpow.pop %v255
    %v257 = vsel %vm167, %v256, 0.0
    %258 = vadd.xlane.f32.xlu0 %v257
    %v259 = vpop.xlane.xlu0 %258
    %v260 = vrcp.pop %v259
    %v261 = vmul.f32 %v256, %v260
    %262 = vst.msk [vmem:[#allocation4] sm:$0x1] %vm167, %v261
    // Predicated region
    $region38: #{tpu_custom_call.1} parent=1 // pred_check
      _
    $region39: #{tpu_custom_call.1} parent=1 // pred_check_branch
      %264 = sbr.rel (0) target = $region41
    $region40: #{tpu_custom_call.1} parent=1 // pred_region
      %266 = vsyncadd [#allocation5], 0
      %s268 = sshll.u32 [#allocation4], 4
      %s269 = int_to_ptr.vmem [resolvable:$true] %s268
      %s270 = sshll.u32 %s9, 4
      %s271 = int_to_ptr.hbm [resolvable:$true] %s270
      %273 = dma.vmem_to_hbm [thread:$0]  %s269, 16, %s271, [#allocation5]
    $region41: #{tpu_custom_call.1} parent=1 // pred_fallthru
      _
    // Predicated region
    $region42: #{tpu_custom_call.1} parent=1 // pred_check
      _
    $region43: #{tpu_custom_call.1} parent=1 // pred_check_branch
      %275 = sbr.rel (0) target = $region45
    $region44: #{tpu_custom_call.1} parent=1 // pred_region
      %277 = vsyncadd [#allocation7], 0
      %s279 = sshll.u32 [#allocation6], 4
      %s280 = int_to_ptr.vmem [resolvable:$true] %s279
      %s281 = sshll.u32 %s10, 4
      %s282 = int_to_ptr.hbm [resolvable:$true] %s281
      %284 = dma.vmem_to_hbm [thread:$0]  %s280, 16, %s282, [#allocation7]
    $region45: #{tpu_custom_call.1} parent=1 // pred_fallthru
      _
    // Predicated region
    $region46: #{tpu_custom_call.1} parent=1 // pred_check
      _
    $region47: #{tpu_custom_call.1} parent=1 // pred_check_branch
      %286 = sbr.rel (0) target = $region49
    $region48: #{tpu_custom_call.1} parent=1 // pred_region
      %288 = dma.done [#allocation5], 16
    $region49: #{tpu_custom_call.1} parent=1 // pred_fallthru
      _
    // Predicated region
    $region50: #{tpu_custom_call.1} parent=1 // pred_check
      _
    $region51: #{tpu_custom_call.1} parent=1 // pred_check_branch
      %290 = sbr.rel (0) target = $region53
    $region52: #{tpu_custom_call.1} parent=1 // pred_region
      %292 = dma.done [#allocation7], 16
    $region53: #{tpu_custom_call.1} parent=1 // pred_fallthru
      _
    %293 = vsyncpa [#allocation5], 1
    %294 = vsyncpa [#allocation7], 1

</llo_original>
